<compile_context>
chip_gen: v5e
topology: v5e:2x2
jax: 0.10.0
libtpu: 0.0.40
codegen_flags: <defaults>
</compile_context>

<pallas_src>
import jax
import jax.numpy as jnp
from jax import lax
from jax.experimental import pallas as pl
from jax.experimental.pallas import tpu as pltpu


def linear_softmax_kernel(x_ref, w_ref, o_ref):
    # x_ref: (B, D_in), w_ref: (D_out, D_in), o_ref: (B, D_out) — all in VMEM.
    # Contract x's last dim against w's last dim (i.e. x @ w.T) on the MXU,
    # accumulating in f32, without materializing a transposed weight in HBM.
    logits = lax.dot_general(
        x_ref[...],
        w_ref[...],
        dimension_numbers=(((1,), (1,)), ((), ())),
        preferred_element_type=jnp.float32,
    )  # (B, D_out), f32

    # Numerically-stable softmax along the class axis (all math in f32).
    m = jnp.max(logits, axis=-1, keepdims=True)
    e = jnp.exp(logits - m)
    denom = jnp.sum(e, axis=-1, keepdims=True)
    o_ref[...] = (e / denom).astype(o_ref.dtype)


@jax.jit
def net_forward(x, w):
    """Pallas equivalent of Net.forward: softmax(Linear(x, bias=False), dim=-1).

    x: (B, D_in); w: (D_out, D_in) in PyTorch nn.Linear convention.
    """
    B, D_in = x.shape
    D_out, D_in_w = w.shape
    assert D_in == D_in_w

    itemsize = jnp.dtype(x.dtype).itemsize
    cost = pl.CostEstimate(
        flops=2 * B * D_in * D_out,
        transcendentals=B * D_out,
        bytes_accessed=(B * D_in + D_out * D_in + B * D_out) * itemsize,
    )

    return pl.pallas_call(
        linear_softmax_kernel,
        out_shape=jax.ShapeDtypeStruct((B, D_out), x.dtype),
        in_specs=[
            pl.BlockSpec(memory_space=pltpu.MemorySpace.VMEM),
            pl.BlockSpec(memory_space=pltpu.MemorySpace.VMEM),
        ],
        out_specs=pl.BlockSpec(memory_space=pltpu.MemorySpace.VMEM),
        cost_estimate=cost,
    )(x, w)


if __name__ == "__main__":
    # Small shapes consistent with the module (generic Linear in_size -> out_size).
    B, IN_SIZE, OUT_SIZE = 8, 32, 4

    key = jax.random.PRNGKey(0)
    kx, kw = jax.random.split(key)

    x = jax.random.normal(kx, (B, IN_SIZE), dtype=jnp.float32)
    # Deterministic weight init mimicking nn.Linear's uniform(-1/sqrt(in), 1/sqrt(in)).
    bound = 1.0 / jnp.sqrt(jnp.float32(IN_SIZE))
    w = jax.random.uniform(
        kw, (OUT_SIZE, IN_SIZE), dtype=jnp.float32, minval=-bound, maxval=bound
    )

    out = net_forward(x, w)
    out = jax.block_until_ready(out)

    # Sanity check against plain JAX reference (exact-division softmax -> tight tol).
    ref = jax.nn.softmax(x @ w.T, axis=-1)
    assert out.shape == (B, OUT_SIZE)
    assert jnp.allclose(out, ref, atol=1e-6, rtol=1e-5), "mismatch vs reference"
    # Rows should sum to 1 to near machine precision now.
    assert jnp.allclose(jnp.sum(out, axis=-1), 1.0, atol=1e-6)

    print("KERNEL_OK")
</pallas_src>

<mosaic_0001>
module attributes {stable_mosaic.version = 11 : i64} {
  func.func @linear_softmax_kernel(%arg0: memref<8x32xf32, #tpu.memory_space<vmem>>, %arg1: memref<4x32xf32, #tpu.memory_space<vmem>>, %arg2: memref<8x4xf32, #tpu.memory_space<vmem>>) attributes {dimension_semantics = [], scalar_prefetch = 0 : i64, scratch_operands = 0 : i64, tpu.core_type = #tpu.core_type<tc>} {
    %c0 = arith.constant 0 : index
    %c0_0 = arith.constant 0 : index
    %0 = vector.load %arg0[%c0, %c0_0] : memref<8x32xf32, #tpu.memory_space<vmem>>, vector<8x32xf32>
    %c0_1 = arith.constant 0 : index
    %c0_2 = arith.constant 0 : index
    %1 = vector.load %arg1[%c0_1, %c0_2] : memref<4x32xf32, #tpu.memory_space<vmem>>, vector<4x32xf32>
    %cst = arith.constant dense<0.000000e+00> : vector<8x4xf32>
    %2 = tpu.matmul %0, %1, %cst {dimension_numbers = #tpu.dot_dimension_numbers<[1], [1], [0], [0], [0, 0, 1, 0], [], []>} : vector<8x32xf32>, vector<4x32xf32>, vector<8x4xf32> -> vector<8x4xf32>
    %cst_3 = arith.constant dense<0xFF800000> : vector<8xf32>
    %3 = vector.multi_reduction <maximumf>, %2, %cst_3 [1] : vector<8x4xf32> to vector<8xf32>
    %4 = vector.shape_cast %3 : vector<8xf32> to vector<8x1xf32>
    %5 = vector.broadcast %4 : vector<8x1xf32> to vector<8x4xf32>
    %6 = arith.subf %2, %5 : vector<8x4xf32>
    %7 = math.exp %6 : vector<8x4xf32>
    %cst_4 = arith.constant dense<0.000000e+00> : vector<8xf32>
    %8 = vector.multi_reduction <add>, %7, %cst_4 [1] : vector<8x4xf32> to vector<8xf32>
    %9 = vector.shape_cast %8 : vector<8xf32> to vector<8x1xf32>
    %10 = vector.broadcast %9 : vector<8x1xf32> to vector<8x4xf32>
    %11 = arith.divf %7, %10 : vector<8x4xf32>
    %c0_5 = arith.constant 0 : index
    %c0_6 = arith.constant 0 : index
    %12 = vector.load %arg2[%c0_5, %c0_6] : memref<8x4xf32, #tpu.memory_space<vmem>>, vector<8x4xf32>
    tpu.vector_store %arg2[%c0_5, %c0_6], %11 {strides = array<i32>} : memref<8x4xf32, #tpu.memory_space<vmem>>, vector<8x4xf32>,
    return
  }
}

</mosaic_0001>

<llo_original>
// kernel: net_forward.1
$region0: #{net_forward.1}
  #allocation0 [shape = 'u32[]', space=smem, size = 0x4, offset = 0x4, fixed_abs, tag = 'smem constant byte address 0x4 - core index']
  #allocation1 [shape = 'u32[72,128]{1,0:T(1,128)}', space=vmem, size = 0x9000, scoped, tag = 'internal scratch']
  %s0 = inlined_call_operand.hbm [shape: f32[8,32], index: 0, kind: input, shape index: {}]
  %s1 = inlined_call_operand.hbm [shape: f32[4,32], index: 1, kind: input, shape index: {}]
  %s2 = inlined_call_operand.vmem [shape: f32[8,4], index: 2, kind: output, shape index: {}]
  %s3 = sld [smem:[#allocation0]]
  $region26: #{net_forward.1} parent=0
    _
  %s5 = ssub.s32 1, %s3
  %s6 = scalar_select 0, %s5, %s3
  $region1: #{net_forward.1} parent=0
    #allocation2 [shape = 'u8[4096]{0}', space=vmem, size = 0x1000, scoped, tag = 'input window, operand 0, single buffered']
    #allocation3 [shape = 's32[1]{0}', space=sflag, size = 0x4, scoped, tag = 'scoped memory for net_forward.1']
    #allocation4 [shape = 'u8[2048]{0}', space=vmem, size = 0x800, scoped, tag = 'input window, operand 1, single buffered']
    #allocation5 [shape = 's32[1]{0}', space=sflag, size = 0x4, scoped, tag = 'scoped memory for net_forward.1']
    %7 = vsyncpa [#allocation3], 0
    %8 = vsyncpa [#allocation5], 0
    // Predicated region
    $region2: #{net_forward.1} parent=1 // pred_check
      _
    $region3: #{net_forward.1} parent=1 // pred_check_branch
      %10 = sbr.rel (0) target = $region5
    $region4: #{net_forward.1} parent=1 // pred_region
      %12 = vsyncadd [#allocation3], 0
      %s14 = sshll.u32 %s0, 4
      %s15 = int_to_ptr.hbm [resolvable:$true] %s14
      %s16 = sshll.u32 [#allocation2], 4
      %s17 = int_to_ptr.vmem [resolvable:$true] %s16
      %19 = dma.hbm_to_vmem [thread:$0]  %s15, 128, %s17, [#allocation3]
    $region5: #{net_forward.1} parent=1 // pred_fallthru
      _
    // Predicated region
    $region6: #{net_forward.1} parent=1 // pred_check
      _
    $region7: #{net_forward.1} parent=1 // pred_check_branch
      %21 = sbr.rel (0) target = $region9
    $region8: #{net_forward.1} parent=1 // pred_region
      %23 = vsyncadd [#allocation5], 0
      %s25 = sshll.u32 %s1, 4
      %s26 = int_to_ptr.hbm [resolvable:$true] %s25
      %s27 = sshll.u32 [#allocation4], 4
      %s28 = int_to_ptr.vmem [resolvable:$true] %s27
      %30 = dma.hbm_to_vmem [thread:$0]  %s26, 64, %s28, [#allocation5]
    $region9: #{net_forward.1} parent=1 // pred_fallthru
      _
    // Predicated region
    $region10: #{net_forward.1} parent=1 // pred_check
      _
    $region11: #{net_forward.1} parent=1 // pred_check_branch
      %32 = sbr.rel (0) target = $region13
    $region12: #{net_forward.1} parent=1 // pred_region
      %34 = dma.done [#allocation3], 128
    $region13: #{net_forward.1} parent=1 // pred_fallthru
      _
    // Predicated region
    $region14: #{net_forward.1} parent=1 // pred_check
      _
    $region15: #{net_forward.1} parent=1 // pred_check_branch
      %36 = sbr.rel (0) target = $region17
    $region16: #{net_forward.1} parent=1 // pred_region
      %38 = dma.done [#allocation5], 64
    $region17: #{net_forward.1} parent=1 // pred_fallthru
      _
    %v39 = vld [vmem:[#allocation2] sm:$0xff]
    %v40 = vld [vmem:[#allocation4] sm:$0xf]
    %vm41 = vcmask 261120
    %v43 = vsel %vm41, %v39, 0
    %v46 = vsel %vm41, %v40, 0
    %48 = vmatpush.xpose.msra.mxu0 0.0
    %49 = vmatpush.xpose.msra.mxu0 0.0
    %50 = vmatpush.xpose.msra.mxu0 0.0
    %51 = vmatpush.xpose.msra.mxu0 0.0
    %52 = vmatpush.xpose.msra.mxu0 0.0
    %53 = vmatpush.xpose.msra.mxu0 0.0
    %54 = vmatpush.xpose.msra.mxu0 0.0
    %55 = vmatpush.xpose.msra.mxu0 0.0
    %56 = vmatpush.xpose.msra.mxu0 0.0
    %57 = vmatpush.xpose.msra.mxu0 0.0
    %58 = vmatpush.xpose.msra.mxu0 0.0
    %59 = vmatpush.xpose.msra.mxu0 0.0
    %60 = vmatpush.xpose.msra.mxu0 0.0
    %61 = vmatpush.xpose.msra.mxu0 0.0
    %62 = vmatpush.xpose.msra.mxu0 0.0
    %63 = vmatpush.xpose.msra.mxu0 %v46
    %64 = vmatmul.f32.gmra.mxu0 %v43
    %v65 = vpop.f32.mrf.mxu0
    %v66 = vadd.f32 0.0, %v65
    %67 = vdwg.mxu0
    %vm68 = vcmask 31744
    %v69 = vsel %vm68, %v66, -inf
    %70 = vmax.xlane.f32.xlu0 %v69
    %v71 = vpop.xlane.xlu0 %70
    %v72 = vsub.f32 %v66, %v71
    %v73 = vmul.f32 %v72, 1.442695
    %v74 = vpow.pop %v73
    %v75 = vsel %vm68, %v74, 0.0
    %76 = vadd.xlane.f32.xlu0 %v75
    %v77 = vpop.xlane.xlu0 %76
    %v78 = vrcp.pop %v77
    %v79 = vmul.f32 %v77, %v78
    %v80 = vsub.f32 1.0, %v79
    %v81 = vmul.f32 %v78, %v80
    %v82 = vadd.f32 %v78, %v81
    %vm83 = vweird.f32 %v77
    %vm84 = vweird.f32 %v78
    %vm85 = vmor %vm83, %vm84
    %v86 = vsel %vm85, %v78, %v82
    %v87 = vand.u32 2147483647, %v77
    %vm88 = vcmp.eq.f32.partialorder %v87, 8.507059e+37
    %v89 = vand.u32 %v77, 2147483648
    %v90 = vor.u32 1.1754944e-38, %v89
    %v91 = vsel %vm88, %v90, %v86
    %v92 = vmul.f32 %v74, %v91
    %93 = vst.msk [vmem:[%s2] sm:$0xff] %vm68, %v92
    // Predicated region
    $region18: #{net_forward.1} parent=1 // pred_check
      _
    $region19: #{net_forward.1} parent=1 // pred_check_branch
      %95 = sbr.rel (0) target = $region21
    $region20: #{net_forward.1} parent=1 // pred_region
      _
    $region21: #{net_forward.1} parent=1 // pred_fallthru
      _
    // Predicated region
    $region22: #{net_forward.1} parent=1 // pred_check
      _
    $region23: #{net_forward.1} parent=1 // pred_check_branch
      %97 = sbr.rel (0) target = $region25
    $region24: #{net_forward.1} parent=1 // pred_region
      _
    $region25: #{net_forward.1} parent=1 // pred_fallthru
      _
    %98 = vsyncpa [#allocation3], 1
    %99 = vsyncpa [#allocation5], 1

</llo_original>
